<compile_context>
chip_gen: v6e
topology: v6e:2x2x1
jax: 0.10.0
libtpu: 0.0.40
codegen_flags: <defaults>
</compile_context>

<pallas_src>
import numpy as np

import jax
import jax.numpy as jnp
from jax.experimental import pallas as pl
from jax.experimental.pallas import tpu as pltpu


def _round_up(x, m):
    return ((x + m - 1) // m) * m


def _round_down(x, m):
    return (x // m) * m


def disentangler_kernel(x_ref, wt_ref, shift_ref, o_ref):
    # (tm, d) @ (d, tn) on the MXU, f32 accumulation.  astype is a no-op when the
    # wrapper already produced a bf16 (row-padded) copy.
    a = x_ref[...].astype(jnp.bfloat16)
    y = jnp.dot(a, wt_ref[...], preferred_element_type=jnp.float32)
    # Folded Linear-bias + eval-BatchNorm affine, then ReLU (dropout == identity in eval).
    y = y + shift_ref[...]
    o_ref[...] = jnp.maximum(y, 0.0).astype(o_ref.dtype)


def _vmem_soft_cap_bytes():
    """~80% of physical VMEM, clamped to [32 MiB, 100 MiB].

    Leaves compiler-internal scratch / pipeline-buffer headroom on v7x (64 MiB
    per TC) while letting v5e/v6e (128 MiB) hold larger resident weights/tiles.
    """
    try:
        cap = int(pltpu.get_tpu_info().vmem_capacity_bytes)
    except Exception:
        cap = 64 << 20  # conservative default (v7x per-TC size)
    return max(32 << 20, min(int(cap * 0.8), 100 << 20))


def disentangler_forward(x, w, b, gamma, beta, running_mean, running_var,
                         eps=1e-5, block_m=1024, out_dtype=jnp.bfloat16):
    """Eval-mode Disentangler forward: relu(BN1d_eval(x @ W^T + b)).

    x: (N, D).  w: (D, D) Linear weight (PyTorch out x in).  b, gamma, beta,
    running_mean, running_var: (D,).  Output dtype defaults to bf16.
    """
    n, d = x.shape
    out_bytes = np.dtype(out_dtype).itemsize
    soft_cap = _vmem_soft_cap_bytes()

    # ---- fold Linear bias + eval-BatchNorm into the weight / one shift (f32) ----
    scale = gamma / jnp.sqrt(running_var + eps)                    # (D,)
    wt_folded = (w.T * scale[None, :]).astype(jnp.bfloat16)        # (D_in, D_out)
    shift_folded = (b - running_mean) * scale + beta               # (D,), f32

    # ---- output-column geometry: lane-dense (multiple of 128) feature dim ----
    dp_out = _round_up(d, 128)
    w_bytes_full = d * dp_out * 2                                  # bf16 folded weight
    if 2 * w_bytes_full <= soft_cap // 2:
        # Whole folded weight stays VMEM-resident across the row grid.
        tn, grid_n = dp_out, 1
    else:
        # Column-tile the weight (double-buffered stream) so it never has to fit
        # whole in VMEM at large D.
        tn = max(128, _round_down((soft_cap // 4) // (4 * d), 128))
        tn = min(tn, dp_out)
        grid_n = pl.cdiv(dp_out, tn)
    dn_pad = tn * grid_n

    # ---- row-tile geometry: balanced tiles derived from the grid size ----
    grid_m = pl.cdiv(n, block_m)
    if grid_m == 1 and n >= 512:
        grid_m = 2          # let the "parallel" M axis shard across two TensorCores
    tm = _round_up(pl.cdiv(n, grid_m), 8)

    # Fit x/out double buffers next to the weight within the VMEM budget.
    x_bytes = x.dtype.itemsize
    w_buffers = 1 if grid_n == 1 else 2
    fixed = w_buffers * d * tn * 2 + 2 * 8 * tn * 4 + (1 << 20)     # weight + shift + misc
    per_row = 2 * d * x_bytes + 2 * tn * out_bytes                  # x + out double buffers
    tm_max = max(8, _round_down((soft_cap - fixed) // per_row, 8))
    tm = max(8, min(tm, tm_max))
    grid_m = pl.cdiv(n, tm)
    tm = _round_up(pl.cdiv(n, grid_m), 8)   # re-balance: total row padding < 8 * grid_m
    n_pad = grid_m * tm

    # ---- inputs: avoid wrapper-side pad/copy passes whenever already aligned ----
    if n_pad == n:
        x_in = x            # read directly from HBM; cast to bf16 inside the kernel
    else:
        # Row padding only.  Padded rows produce relu(shift) != 0 but are sliced off.
        x_in = jnp.zeros((n_pad, d), jnp.bfloat16).at[:n, :].set(x.astype(jnp.bfloat16))

    if dn_pad == d:
        wt_in = wt_folded
        shift_in = shift_folded.reshape(1, d)
    else:
        wt_in = jnp.zeros((d, dn_pad), jnp.bfloat16).at[:, :d].set(wt_folded)
        shift_in = jnp.zeros((1, dn_pad), jnp.float32).at[0, :d].set(shift_folded)

    cost = pl.CostEstimate(
        flops=2 * n_pad * d * dn_pad,
        transcendentals=0,
        bytes_accessed=(n_pad * d * x_in.dtype.itemsize
                        + (grid_m if grid_n > 1 else 1) * d * dn_pad * 2
                        + dn_pad * 4
                        + n_pad * dn_pad * out_bytes),
    )

    # Conservative (double-buffered-weight) estimate so a single-buffer fallback
    # still fits under the declared limit.
    vmem_needed = (2 * d * tn * 2 + 2 * 8 * tn * 4
                   + 2 * tm * d * x_in.dtype.itemsize + 2 * tm * tn * out_bytes)
    vmem_limit = int(min(max(vmem_needed + (4 << 20), 32 << 20), soft_cap))

    def call(single_buffer_consts):
        if single_buffer_consts:
            # Constant-index weight/shift: double-buffering them is pure VMEM waste.
            w_spec = pl.BlockSpec((d, tn), lambda i, j: (0, j),
                                  pipeline_mode=pl.Buffered(1))
            s_spec = pl.BlockSpec((1, tn), lambda i, j: (0, j),
                                  pipeline_mode=pl.Buffered(1))
        else:
            w_spec = pl.BlockSpec((d, tn), lambda i, j: (0, j))
            s_spec = pl.BlockSpec((1, tn), lambda i, j: (0, j))
        return pl.pallas_call(
            disentangler_kernel,
            out_shape=jax.ShapeDtypeStruct((n_pad, dn_pad), out_dtype),
            grid_spec=pltpu.PrefetchScalarGridSpec(
                num_scalar_prefetch=0,
                grid=(grid_m, grid_n),
                in_specs=[
                    pl.BlockSpec((tm, d), lambda i, j: (i, 0)),   # x rows stream
                    w_spec,                                        # folded weight
                    s_spec,                                        # folded shift
                ],
                out_specs=pl.BlockSpec((tm, tn), lambda i, j: (i, j)),
            ),
            compiler_params=pltpu.CompilerParams(
                dimension_semantics=("parallel", "parallel"),
                vmem_limit_bytes=vmem_limit,
            ),
            cost_estimate=cost,
        )(x_in, wt_in, shift_in)

    if grid_n == 1:
        try:
            out_p = jax.block_until_ready(call(True))
        except Exception:
            # This JAX build rejects Buffered(1) on a top-level pallas_call spec;
            # fall back to default double buffering (correctness unaffected).
            out_p = call(False)
    else:
        out_p = call(False)

    # TODO(synk): training-mode dropout (random mask) and batch-statistics BN are not
    #             implemented; this kernel reproduces module.eval() semantics only.
    if n_pad != n or dn_pad != d:
        out_p = out_p[:n, :d]
    return out_p


def _reference(x, w, b, gamma, beta, running_mean, running_var, eps=1e-5):
    y = x @ w.T + b
    y = (y - running_mean) / jnp.sqrt(running_var + eps) * gamma + beta
    return jnp.maximum(y, 0.0)


if __name__ == "__main__":
    N = 8        # batch
    D = 32       # emd_dim

    key = jax.random.PRNGKey(0)
    kx, kw, kb, kg, kbe, km, kv = jax.random.split(key, 7)

    x = jax.random.normal(kx, (N, D), dtype=jnp.float32)

    # Deterministic, non-trivial parameter init (synthetic, no checkpoint load).
    bound = 1.0 / jnp.sqrt(D)
    w = jax.random.uniform(kw, (D, D), minval=-bound, maxval=bound, dtype=jnp.float32)
    b = jax.random.uniform(kb, (D,), minval=-bound, maxval=bound, dtype=jnp.float32)
    gamma = 1.0 + 0.1 * jax.random.normal(kg, (D,), dtype=jnp.float32)
    beta = 0.1 * jax.random.normal(kbe, (D,), dtype=jnp.float32)
    running_mean = 0.1 * jax.random.normal(km, (D,), dtype=jnp.float32)
    running_var = 1.0 + 0.1 * jax.random.uniform(kv, (D,), dtype=jnp.float32)

    out = disentangler_forward(x, w, b, gamma, beta, running_mean, running_var)
    out = jax.block_until_ready(out)

    ref = _reference(x, w, b, gamma, beta, running_mean, running_var)
    assert out.shape == (N, D)
    # bf16 weights/activations on the MXU (f32 accumulate) + bf16 output -> loose tol.
    assert jnp.allclose(out.astype(jnp.float32), ref, atol=5e-2, rtol=5e-2), \
        "mismatch vs reference"

    print("KERNEL_OK")
</pallas_src>

<mosaic_0001>
module attributes {stable_mosaic.version = 11 : i64} {
  func.func @disentangler_kernel(%arg0: i32, %arg1: i32, %arg2: memref<8x32xf32, #tpu.memory_space<vmem>>, %arg3: memref<32x128xbf16, #tpu.memory_space<vmem>>, %arg4: memref<1x128xf32, #tpu.memory_space<vmem>>, %arg5: memref<8x128xbf16, #tpu.memory_space<vmem>>) attributes {dimension_semantics = [#tpu.dimension_semantics<parallel>, #tpu.dimension_semantics<parallel>], iteration_bounds = array<i64: 1, 1>, scalar_prefetch = 0 : i64, scratch_operands = 0 : i64, tpu.core_type = #tpu.core_type<tc>, window_params = [{transform_indices = @transform_0, window_bounds = array<i64: 8, 32>}, {pipeline_mode = #tpu.pipeline_mode<synchronous>, transform_indices = @transform_1, window_bounds = array<i64: 32, 128>}, {pipeline_mode = #tpu.pipeline_mode<synchronous>, transform_indices = @transform_2, window_bounds = array<i64: 1, 128>}, {transform_indices = @transform_3, window_bounds = array<i64: 8, 128>}]} {
    %c0 = arith.constant 0 : index
    %c0_0 = arith.constant 0 : index
    %0 = vector.load %arg2[%c0, %c0_0] : memref<8x32xf32, #tpu.memory_space<vmem>>, vector<8x32xf32>
    %1 = arith.truncf %0 : vector<8x32xf32> to vector<8x32xbf16>
    %c0_1 = arith.constant 0 : index
    %c0_2 = arith.constant 0 : index
    %2 = vector.load %arg3[%c0_1, %c0_2] : memref<32x128xbf16, #tpu.memory_space<vmem>>, vector<32x128xbf16>
    %cst = arith.constant dense<0.000000e+00> : vector<8x128xf32>
    %3 = tpu.matmul %1, %2, %cst {dimension_numbers = #tpu.dot_dimension_numbers<[1], [0], [0], [1], [0, 0, 1, 1], [], []>} : vector<8x32xbf16>, vector<32x128xbf16>, vector<8x128xf32> -> vector<8x128xf32>
    %c0_3 = arith.constant 0 : index
    %c0_4 = arith.constant 0 : index
    %4 = vector.load %arg4[%c0_3, %c0_4] : memref<1x128xf32, #tpu.memory_space<vmem>>, vector<1x128xf32>
    %5 = vector.broadcast %4 : vector<1x128xf32> to vector<8x128xf32>
    %6 = arith.addf %3, %5 : vector<8x128xf32>
    %cst_5 = arith.constant 0.000000e+00 : f32
    %7 = vector.broadcast %cst_5 : f32 to vector<8x128xf32>
    %8 = arith.maximumf %6, %7 : vector<8x128xf32>
    %9 = arith.truncf %8 : vector<8x128xf32> to vector<8x128xbf16>
    %c0_6 = arith.constant 0 : index
    %c0_7 = arith.constant 0 : index
    %10 = vector.load %arg5[%c0_6, %c0_7] : memref<8x128xbf16, #tpu.memory_space<vmem>>, vector<8x128xbf16>
    tpu.vector_store %arg5[%c0_6, %c0_7], %9 {strides = array<i32>} : memref<8x128xbf16, #tpu.memory_space<vmem>>, vector<8x128xbf16>,
    return
  }
  func.func @transform_0(%arg0: i32, %arg1: i32) -> (i32, i32) {
    %c0_i32 = arith.constant 0 : i32
    %c0_i32_0 = arith.constant 0 : i32
    return %arg0, %c0_i32 : i32, i32
  }
  func.func @transform_1(%arg0: i32, %arg1: i32) -> (i32, i32) {
    %c0_i32 = arith.constant 0 : i32
    %c0_i32_0 = arith.constant 0 : i32
    return %c0_i32, %arg1 : i32, i32
  }
  func.func @transform_2(%arg0: i32, %arg1: i32) -> (i32, i32) {
    %c0_i32 = arith.constant 0 : i32
    %c0_i32_0 = arith.constant 0 : i32
    return %c0_i32, %arg1 : i32, i32
  }
  func.func @transform_3(%arg0: i32, %arg1: i32) -> (i32, i32) {
    %c0_i32 = arith.constant 0 : i32
    return %arg0, %arg1 : i32, i32
  }
}

module attributes {stable_mosaic.version = 11 : i64} {
  func.func @disentangler_kernel(%arg0: i32, %arg1: i32, %arg2: memref<8x32xf32, #tpu.memory_space<vmem>>, %arg3: memref<32x128xbf16, #tpu.memory_space<vmem>>, %arg4: memref<1x128xf32, #tpu.memory_space<vmem>>, %arg5: memref<8x128xbf16, #tpu.memory_space<vmem>>) attributes {dimension_semantics = [#tpu.dimension_semantics<parallel>, #tpu.dimension_semantics<parallel>], iteration_bounds = array<i64: 1, 1>, scalar_prefetch = 0 : i64, scratch_operands = 0 : i64, tpu.core_type = #tpu.core_type<tc>, window_params = [{transform_indices = @transform_0, window_bounds = array<i64: 8, 32>}, {transform_indices = @transform_1, window_bounds = array<i64: 32, 128>}, {transform_indices = @transform_2, window_bounds = array<i64: 1, 128>}, {transform_indices = @transform_3, window_bounds = array<i64: 8, 128>}]} {
    %c0 = arith.constant 0 : index
    %c0_0 = arith.constant 0 : index
    %0 = vector.load %arg2[%c0, %c0_0] : memref<8x32xf32, #tpu.memory_space<vmem>>, vector<8x32xf32>
    %1 = arith.truncf %0 : vector<8x32xf32> to vector<8x32xbf16>
    %c0_1 = arith.constant 0 : index
    %c0_2 = arith.constant 0 : index
    %2 = vector.load %arg3[%c0_1, %c0_2] : memref<32x128xbf16, #tpu.memory_space<vmem>>, vector<32x128xbf16>
    %cst = arith.constant dense<0.000000e+00> : vector<8x128xf32>
    %3 = tpu.matmul %1, %2, %cst {dimension_numbers = #tpu.dot_dimension_numbers<[1], [0], [0], [1], [0, 0, 1, 1], [], []>} : vector<8x32xbf16>, vector<32x128xbf16>, vector<8x128xf32> -> vector<8x128xf32>
    %c0_3 = arith.constant 0 : index
    %c0_4 = arith.constant 0 : index
    %4 = vector.load %arg4[%c0_3, %c0_4] : memref<1x128xf32, #tpu.memory_space<vmem>>, vector<1x128xf32>
    %5 = vector.broadcast %4 : vector<1x128xf32> to vector<8x128xf32>
    %6 = arith.addf %3, %5 : vector<8x128xf32>
    %cst_5 = arith.constant 0.000000e+00 : f32
    %7 = vector.broadcast %cst_5 : f32 to vector<8x128xf32>
    %8 = arith.maximumf %6, %7 : vector<8x128xf32>
    %9 = arith.truncf %8 : vector<8x128xf32> to vector<8x128xbf16>
    %c0_6 = arith.constant 0 : index
    %c0_7 = arith.constant 0 : index
    %10 = vector.load %arg5[%c0_6, %c0_7] : memref<8x128xbf16, #tpu.memory_space<vmem>>, vector<8x128xbf16>
    tpu.vector_store %arg5[%c0_6, %c0_7], %9 {strides = array<i32>} : memref<8x128xbf16, #tpu.memory_space<vmem>>, vector<8x128xbf16>,
    return
  }
  func.func @transform_0(%arg0: i32, %arg1: i32) -> (i32, i32) {
    %c0_i32 = arith.constant 0 : i32
    %c0_i32_0 = arith.constant 0 : i32
    return %arg0, %c0_i32 : i32, i32
  }
  func.func @transform_1(%arg0: i32, %arg1: i32) -> (i32, i32) {
    %c0_i32 = arith.constant 0 : i32
    %c0_i32_0 = arith.constant 0 : i32
    return %c0_i32, %arg1 : i32, i32
  }
  func.func @transform_2(%arg0: i32, %arg1: i32) -> (i32, i32) {
    %c0_i32 = arith.constant 0 : i32
    %c0_i32_0 = arith.constant 0 : i32
    return %c0_i32, %arg1 : i32, i32
  }
  func.func @transform_3(%arg0: i32, %arg1: i32) -> (i32, i32) {
    %c0_i32 = arith.constant 0 : i32
    return %arg0, %arg1 : i32, i32
  }
}

</mosaic_0001>

<llo_original>
// kernel: tpu_custom_call.1
$region0: #{tpu_custom_call.1}
  #allocation0 [shape = 'u32[]', space=smem, size = 0x4, offset = 0x4, fixed_abs, tag = 'smem constant byte address 0x4 - core index']
  #allocation1 [shape = 'u32[144,128]{1,0:T(1,128)}', space=vmem, size = 0x12000, scoped, tag = 'internal scratch']
  %s0 = inlined_call_operand.hbm [shape: f32[8,32], index: 0, kind: input, shape index: {}]
  %s1 = inlined_call_operand.hbm [shape: bf16[32,128], index: 1, kind: input, shape index: {}]
  %s2 = inlined_call_operand.vmem [shape: f32[1,128], index: 2, kind: input, shape index: {}]
  %s3 = inlined_call_operand.hbm [shape: bf16[8,128], index: 3, kind: output, shape index: {}]
  %s4 = sld [smem:[#allocation0]]
  $region30: #{tpu_custom_call.1} parent=0
    _
  %s6 = ssub.s32 1, %s4
  %s7 = scalar_select 0, %s6, %s4
  $region1: #{tpu_custom_call.1} parent=0
    #allocation2 [shape = 'u8[4096]{0}', space=vmem, size = 0x1000, scoped, tag = 'input window, operand 0, single buffered']
    #allocation3 [shape = 's32[1]{0}', space=sflag, size = 0x4, scoped, tag = 'scoped memory for tpu_custom_call.1']
    #allocation4 [shape = 's32[1]{0}', space=sflag, size = 0x4, scoped, tag = 'scoped memory for tpu_custom_call.1']
    #allocation5 [shape = 'u8[8192]{0}', space=vmem, size = 0x2000, scoped, tag = 'input window, operand 1, single buffered']
    #allocation6 [shape = 's32[1]{0}', space=sflag, size = 0x4, scoped, tag = 'scoped memory for tpu_custom_call.1']
    #allocation7 [shape = 'u8[2048]{0}', space=vmem, size = 0x800, scoped, tag = 'output window, operand 0, single buffered']
    %8 = vsyncpa [#allocation3], 0
    %9 = vsyncpa [#allocation6], 0
    %10 = vsyncpa [#allocation4], 0
    // Predicated region
    $region2: #{tpu_custom_call.1} parent=1 // pred_check
      _
    $region3: #{tpu_custom_call.1} parent=1 // pred_check_branch
      %12 = sbr.rel (0) target = $region5
    $region4: #{tpu_custom_call.1} parent=1 // pred_region
      %s14 = ssub.s32 128, 128
      %15 = vsyncadd [#allocation3], %s14
      %s17 = sshll.u32 [#allocation2], 4
      %s18 = int_to_ptr.vmem [resolvable:$true] %s17
      %20 = dma.hbm_to_vmem [thread:$0]  %s0, 128, %s18, [#allocation3]
    $region5: #{tpu_custom_call.1} parent=1 // pred_fallthru
      _
    // Predicated region
    $region6: #{tpu_custom_call.1} parent=1 // pred_check
      _
    $region7: #{tpu_custom_call.1} parent=1 // pred_check_branch
      %22 = sbr.rel (0) target = $region9
    $region8: #{tpu_custom_call.1} parent=1 // pred_region
      %s24 = ssub.s32 256, 256
      %25 = vsyncadd [#allocation6], %s24
      %s26 = sshll.u32 [#allocation5], 4
      %s27 = int_to_ptr.vmem [resolvable:$true] %s26
      %32 = dma.hbm_to_vmem [thread:$0]  %s1, 256, %s27, [#allocation6], 64, 64, 4
    $region9: #{tpu_custom_call.1} parent=1 // pred_fallthru
      _
    // Predicated region
    $region10: #{tpu_custom_call.1} parent=1 // pred_check
      _
    $region11: #{tpu_custom_call.1} parent=1 // pred_check_branch
      %34 = sbr.rel (0) target = $region13
    $region12: #{tpu_custom_call.1} parent=1 // pred_region
      _
    $region13: #{tpu_custom_call.1} parent=1 // pred_fallthru
      _
    // Predicated region
    $region14: #{tpu_custom_call.1} parent=1 // pred_check
      _
    $region15: #{tpu_custom_call.1} parent=1 // pred_check_branch
      %36 = sbr.rel (0) target = $region17
    $region16: #{tpu_custom_call.1} parent=1 // pred_region
      %37 = dma.done [#allocation3], 128
    $region17: #{tpu_custom_call.1} parent=1 // pred_fallthru
      _
    // Predicated region
    $region18: #{tpu_custom_call.1} parent=1 // pred_check
      _
    $region19: #{tpu_custom_call.1} parent=1 // pred_check_branch
      %39 = sbr.rel (0) target = $region21
    $region20: #{tpu_custom_call.1} parent=1 // pred_region
      %40 = dma.done [#allocation6], 256
    $region21: #{tpu_custom_call.1} parent=1 // pred_fallthru
      _
    %v42 = vld [vmem:[#allocation2] sm:$0xff]
    %v43 = vpack.c.bf16 %v42, %v42
    %v44 = vld [vmem:[#allocation5] sm:$0xf]
    %v45 = vld [vmem:[#allocation5 + $0x4] sm:$0xf]
    %v46 = vld [vmem:[#allocation5 + $0x8] sm:$0xf]
    %v47 = vld [vmem:[#allocation5 + $0xc] sm:$0xf]
    %v48 = vld [vmem:[%s2] sm:$0x1]
    %v50 = vlaneseq
    %v51 = vshrl.u32 %v50, 7
    %v52 = vsub.s32 0, %v51
    %v53 = vrot.slane %v48, %v52
    %v59 = vunpack.c.l.b16 %v44
    %v60 = vunpack.c.l.b16 %v45
    %v61 = vunpack.c.l.b16 %v46
    %v62 = vunpack.c.l.b16 %v47
    %v63 = vpack.c.b16 %v60, %v59
    %v64 = vpack.c.b16 %v62, %v61
    %vm67 = vcmask 261120
    %v69 = vsel %vm67, %v43, 0
    %71 = vmatprep.subr.bf16.mxu0 0
    %72 = vmatpush1.bf16.msra.mxu0 0
    %73 = vmatprep.subr.bf16.mxu0 0
    %74 = vmatpush1.bf16.msra.mxu0 0
    %75 = vmatprep.subr.bf16.mxu0 0
    %76 = vmatpush1.bf16.msra.mxu0 0
    %77 = vmatprep.subr.bf16.mxu0 0
    %78 = vmatpush1.bf16.msra.mxu0 0
    %79 = vmatprep.subr.bf16.mxu0 0
    %80 = vmatpush1.bf16.msra.mxu0 0
    %81 = vmatprep.subr.bf16.mxu0 0
    %82 = vmatpush1.bf16.msra.mxu0 0
    %83 = vmatprep.subr.bf16.mxu0 0
    %84 = vmatpush1.bf16.msra.mxu0 %v64
    %85 = vmatprep.subr.bf16.mxu0 0
    %86 = vmatpush1.bf16.msra.mxu0 %v63
    %87 = vmatprep.subr.bf16.mxu0 0
    %88 = vmatpush2.bf16.msra.mxu0 0
    %89 = vmatprep.subr.bf16.mxu0 0
    %90 = vmatpush2.bf16.msra.mxu0 0
    %91 = vmatprep.subr.bf16.mxu0 0
    %92 = vmatpush2.bf16.msra.mxu0 0
    %93 = vmatprep.subr.bf16.mxu0 0
    %94 = vmatpush2.bf16.msra.mxu0 0
    %95 = vmatprep.subr.bf16.mxu0 0
    %96 = vmatpush2.bf16.msra.mxu0 0
    %97 = vmatprep.subr.bf16.mxu0 0
    %98 = vmatpush2.bf16.msra.mxu0 0
    %99 = vmatprep.subr.bf16.mxu0 0
    %100 = vmatpush2.bf16.msra.mxu0 0
    %101 = vmatprep.subr.bf16.mxu0 0
    %102 = vmatpush2.bf16.msra.mxu0 0
    %103 = vmatprep.mubr.bf16.mxu0 0
    %104 = vmatmul.mubr.bf16.gmra.mxu0 %v69
    %v105 = vpop.f32.mrf.mxu0
    %v106 = vadd.f32 %v53, %v105
    %v107 = vpop.f32.mrf.mxu0
    %v108 = vpop.f32.mrf.mxu0
    %v109 = vpop.f32.mrf.mxu0
    %110 = vdwg.mxu0
    %v111 = vmax.f32 %v106, 0.0
    %v112 = vpack.c.bf16 %v111, %v111
    %113 = vst [vmem:[#allocation7] sm:$0xf] %v112
    // Predicated region
    $region22: #{tpu_custom_call.1} parent=1 // pred_check
      _
    $region23: #{tpu_custom_call.1} parent=1 // pred_check_branch
      %115 = sbr.rel (0) target = $region25
    $region24: #{tpu_custom_call.1} parent=1 // pred_region
      %s117 = ssub.s32 64, 64
      %118 = vsyncadd [#allocation4], %s117
      %s120 = sshll.u32 [#allocation7], 4
      %s121 = int_to_ptr.vmem [resolvable:$true] %s120
      %123 = dma.vmem_to_hbm [thread:$0]  %s121, 64, %s3, [#allocation4]
    $region25: #{tpu_custom_call.1} parent=1 // pred_fallthru
      _
    // Predicated region
    $region26: #{tpu_custom_call.1} parent=1 // pred_check
      _
    $region27: #{tpu_custom_call.1} parent=1 // pred_check_branch
      %125 = sbr.rel (0) target = $region29
    $region28: #{tpu_custom_call.1} parent=1 // pred_region
      %126 = dma.done [#allocation4], 64
    $region29: #{tpu_custom_call.1} parent=1 // pred_fallthru
      _
    %127 = vsyncpa [#allocation3], 1
    %128 = vsyncpa [#allocation6], 1
    %129 = vsyncpa [#allocation4], 1

// kernel: tpu_custom_call.1
$region0: #{tpu_custom_call.1}
  #allocation0 [shape = 'u32[]', space=smem, size = 0x4, offset = 0x4, fixed_abs, tag = 'smem constant byte address 0x4 - core index']
  #allocation1 [shape = 'u32[144,128]{1,0:T(1,128)}', space=vmem, size = 0x12000, scoped, tag = 'internal scratch']
  %s0 = inlined_call_operand.hbm [shape: f32[8,32], index: 0, kind: input, shape index: {}]
  %s1 = inlined_call_operand.hbm [shape: bf16[32,128], index: 1, kind: input, shape index: {}]
  %s2 = inlined_call_operand.vmem [shape: f32[1,128], index: 2, kind: input, shape index: {}]
  %s3 = inlined_call_operand.hbm [shape: bf16[8,128], index: 3, kind: output, shape index: {}]
  %s4 = sld [smem:[#allocation0]]
  $region30: #{tpu_custom_call.1} parent=0
    _
  %s6 = ssub.s32 1, %s4
  %s7 = scalar_select 0, %s6, %s4
  $region1: #{tpu_custom_call.1} parent=0
    #allocation2 [shape = 'u8[4096]{0}', space=vmem, size = 0x1000, scoped, tag = 'input window, operand 0, single buffered']
    #allocation3 [shape = 's32[1]{0}', space=sflag, size = 0x4, scoped, tag = 'scoped memory for tpu_custom_call.1']
    #allocation4 [shape = 's32[1]{0}', space=sflag, size = 0x4, scoped, tag = 'scoped memory for tpu_custom_call.1']
    #allocation5 [shape = 'u8[8192]{0}', space=vmem, size = 0x2000, scoped, tag = 'input window, operand 1, single buffered']
    #allocation6 [shape = 's32[1]{0}', space=sflag, size = 0x4, scoped, tag = 'scoped memory for tpu_custom_call.1']
    #allocation7 [shape = 'u8[2048]{0}', space=vmem, size = 0x800, scoped, tag = 'output window, operand 0, single buffered']
    %8 = vsyncpa [#allocation3], 0
    %9 = vsyncpa [#allocation6], 0
    %10 = vsyncpa [#allocation4], 0
    // Predicated region
    $region2: #{tpu_custom_call.1} parent=1 // pred_check
      _
    $region3: #{tpu_custom_call.1} parent=1 // pred_check_branch
      %12 = sbr.rel (0) target = $region5
    $region4: #{tpu_custom_call.1} parent=1 // pred_region
      %s14 = ssub.s32 128, 128
      %15 = vsyncadd [#allocation3], %s14
      %s17 = sshll.u32 [#allocation2], 4
      %s18 = int_to_ptr.vmem [resolvable:$true] %s17
      %20 = dma.hbm_to_vmem [thread:$0]  %s0, 128, %s18, [#allocation3]
    $region5: #{tpu_custom_call.1} parent=1 // pred_fallthru
      _
    // Predicated region
    $region6: #{tpu_custom_call.1} parent=1 // pred_check
      _
    $region7: #{tpu_custom_call.1} parent=1 // pred_check_branch
      %22 = sbr.rel (0) target = $region9
    $region8: #{tpu_custom_call.1} parent=1 // pred_region
      %s24 = ssub.s32 256, 256
      %25 = vsyncadd [#allocation6], %s24
      %s26 = sshll.u32 [#allocation5], 4
      %s27 = int_to_ptr.vmem [resolvable:$true] %s26
      %32 = dma.hbm_to_vmem [thread:$0]  %s1, 256, %s27, [#allocation6], 64, 64, 4
    $region9: #{tpu_custom_call.1} parent=1 // pred_fallthru
      _
    // Predicated region
    $region10: #{tpu_custom_call.1} parent=1 // pred_check
      _
    $region11: #{tpu_custom_call.1} parent=1 // pred_check_branch
      %34 = sbr.rel (0) target = $region13
    $region12: #{tpu_custom_call.1} parent=1 // pred_region
      _
    $region13: #{tpu_custom_call.1} parent=1 // pred_fallthru
      _
    // Predicated region
    $region14: #{tpu_custom_call.1} parent=1 // pred_check
      _
    $region15: #{tpu_custom_call.1} parent=1 // pred_check_branch
      %36 = sbr.rel (0) target = $region17
    $region16: #{tpu_custom_call.1} parent=1 // pred_region
      %37 = dma.done [#allocation3], 128
    $region17: #{tpu_custom_call.1} parent=1 // pred_fallthru
      _
    // Predicated region
    $region18: #{tpu_custom_call.1} parent=1 // pred_check
      _
    $region19: #{tpu_custom_call.1} parent=1 // pred_check_branch
      %39 = sbr.rel (0) target = $region21
    $region20: #{tpu_custom_call.1} parent=1 // pred_region
      %40 = dma.done [#allocation6], 256
    $region21: #{tpu_custom_call.1} parent=1 // pred_fallthru
      _
    %v42 = vld [vmem:[#allocation2] sm:$0xff]
    %v43 = vpack.c.bf16 %v42, %v42
    %v44 = vld [vmem:[#allocation5] sm:$0xf]
    %v45 = vld [vmem:[#allocation5 + $0x4] sm:$0xf]
    %v46 = vld [vmem:[#allocation5 + $0x8] sm:$0xf]
    %v47 = vld [vmem:[#allocation5 + $0xc] sm:$0xf]
    %v48 = vld [vmem:[%s2] sm:$0x1]
    %v50 = vlaneseq
    %v51 = vshrl.u32 %v50, 7
    %v52 = vsub.s32 0, %v51
    %v53 = vrot.slane %v48, %v52
    %v59 = vunpack.c.l.b16 %v44
    %v60 = vunpack.c.l.b16 %v45
    %v61 = vunpack.c.l.b16 %v46
    %v62 = vunpack.c.l.b16 %v47
    %v63 = vpack.c.b16 %v60, %v59
    %v64 = vpack.c.b16 %v62, %v61
    %vm67 = vcmask 261120
    %v69 = vsel %vm67, %v43, 0
    %71 = vmatprep.subr.bf16.mxu0 0
    %72 = vmatpush1.bf16.msra.mxu0 0
    %73 = vmatprep.subr.bf16.mxu0 0
    %74 = vmatpush1.bf16.msra.mxu0 0
    %75 = vmatprep.subr.bf16.mxu0 0
    %76 = vmatpush1.bf16.msra.mxu0 0
    %77 = vmatprep.subr.bf16.mxu0 0
    %78 = vmatpush1.bf16.msra.mxu0 0
    %79 = vmatprep.subr.bf16.mxu0 0
    %80 = vmatpush1.bf16.msra.mxu0 0
    %81 = vmatprep.subr.bf16.mxu0 0
    %82 = vmatpush1.bf16.msra.mxu0 0
    %83 = vmatprep.subr.bf16.mxu0 0
    %84 = vmatpush1.bf16.msra.mxu0 %v64
    %85 = vmatprep.subr.bf16.mxu0 0
    %86 = vmatpush1.bf16.msra.mxu0 %v63
    %87 = vmatprep.subr.bf16.mxu0 0
    %88 = vmatpush2.bf16.msra.mxu0 0
    %89 = vmatprep.subr.bf16.mxu0 0
    %90 = vmatpush2.bf16.msra.mxu0 0
    %91 = vmatprep.subr.bf16.mxu0 0
    %92 = vmatpush2.bf16.msra.mxu0 0
    %93 = vmatprep.subr.bf16.mxu0 0
    %94 = vmatpush2.bf16.msra.mxu0 0
    %95 = vmatprep.subr.bf16.mxu0 0
    %96 = vmatpush2.bf16.msra.mxu0 0
    %97 = vmatprep.subr.bf16.mxu0 0
    %98 = vmatpush2.bf16.msra.mxu0 0
    %99 = vmatprep.subr.bf16.mxu0 0
    %100 = vmatpush2.bf16.msra.mxu0 0
    %101 = vmatprep.subr.bf16.mxu0 0
    %102 = vmatpush2.bf16.msra.mxu0 0
    %103 = vmatprep.mubr.bf16.mxu0 0
    %104 = vmatmul.mubr.bf16.gmra.mxu0 %v69
    %v105 = vpop.f32.mrf.mxu0
    %v106 = vadd.f32 %v53, %v105
    %v107 = vpop.f32.mrf.mxu0
    %v108 = vpop.f32.mrf.mxu0
    %v109 = vpop.f32.mrf.mxu0
    %110 = vdwg.mxu0
    %v111 = vmax.f32 %v106, 0.0
    %v112 = vpack.c.bf16 %v111, %v111
    %113 = vst [vmem:[#allocation7] sm:$0xf] %v112
    // Predicated region
    $region22: #{tpu_custom_call.1} parent=1 // pred_check
      _
    $region23: #{tpu_custom_call.1} parent=1 // pred_check_branch
      %115 = sbr.rel (0) target = $region25
    $region24: #{tpu_custom_call.1} parent=1 // pred_region
      %s117 = ssub.s32 64, 64
      %118 = vsyncadd [#allocation4], %s117
      %s120 = sshll.u32 [#allocation7], 4
      %s121 = int_to_ptr.vmem [resolvable:$true] %s120
      %123 = dma.vmem_to_hbm [thread:$0]  %s121, 64, %s3, [#allocation4]
    $region25: #{tpu_custom_call.1} parent=1 // pred_fallthru
      _
    // Predicated region
    $region26: #{tpu_custom_call.1} parent=1 // pred_check
      _
    $region27: #{tpu_custom_call.1} parent=1 // pred_check_branch
      %125 = sbr.rel (0) target = $region29
    $region28: #{tpu_custom_call.1} parent=1 // pred_region
      %126 = dma.done [#allocation4], 64
    $region29: #{tpu_custom_call.1} parent=1 // pred_fallthru
      _
    %127 = vsyncpa [#allocation3], 1
    %128 = vsyncpa [#allocation6], 1
    %129 = vsyncpa [#allocation4], 1

</llo_original>
